<compile_context>
chip_gen: v6e
topology: v6e:2x2x1
jax: 0.10.0
libtpu: 0.0.40
codegen_flags: <defaults>
</compile_context>

<pallas_src>
import functools
import math

import jax
import jax.numpy as jnp
from jax.experimental import pallas as pl
from jax.experimental.pallas import tpu as pltpu


def _gelu_exact(x):
    # PyTorch nn.GELU() default = exact erf formulation.
    return 0.5 * x * (1.0 + jax.lax.erf(x * (1.0 / math.sqrt(2.0))))


def _se_kernel(x_ref, w1t_ref, b1_ref, w2t_ref, b2_ref, o_ref, *, d):
    # x_ref / o_ref block: (TB, 3*d) -- one row per batch sample, the three
    # "modalities" laid out contiguously along the lane axis.
    w1t = w1t_ref[...].astype(jnp.float32)   # (3, 3)  = W1.T  (in, out)
    w2t = w2t_ref[...].astype(jnp.float32)   # (3, 3)  = W2.T
    b1 = b1_ref[...].astype(jnp.float32)     # (1, 3)
    b2 = b2_ref[...].astype(jnp.float32)     # (1, 3)

    # Native-dtype modality tiles (kept for the final rescale).
    x0 = x_ref[:, 0 * d:1 * d]               # (TB, d)
    x1 = x_ref[:, 1 * d:2 * d]
    x2 = x_ref[:, 2 * d:3 * d]

    # AdaptiveAvgPool2d((3,1)) with H==3  ==> per-(batch, modality) mean.
    # Only the reduction / gate path is promoted to f32.
    a0 = jnp.mean(x0.astype(jnp.float32), axis=-1, keepdims=True)   # (TB, 1)
    a1 = jnp.mean(x1.astype(jnp.float32), axis=-1, keepdims=True)
    a2 = jnp.mean(x2.astype(jnp.float32), axis=-1, keepdims=True)

    # fc1: Linear(3,3)+GELU.   h[b, j] = sum_i avg[b, i] * W1[j, i] + b1[j]
    # Pure VPU broadcast-multiply-add; a 3x3 contraction must not touch the MXU.
    h = a0 * w1t[0:1, :] + a1 * w1t[1:2, :] + a2 * w1t[2:3, :] + b1  # (TB, 3)
    h = _gelu_exact(h)

    # fc2: Linear(3,3) -> GELU -> Sigmoid.
    y = (h[:, 0:1] * w2t[0:1, :] + h[:, 1:2] * w2t[1:2, :]
         + h[:, 2:3] * w2t[2:3, :] + b2)                             # (TB, 3)
    y = jax.nn.sigmoid(_gelu_exact(y))

    # x * y.unsqueeze(2): rescale each modality slab in native dtype.
    dt = o_ref.dtype
    o_ref[:, 0 * d:1 * d] = x0 * y[:, 0:1].astype(dt)
    o_ref[:, 1 * d:2 * d] = x1 * y[:, 1:2].astype(dt)
    o_ref[:, 2 * d:3 * d] = x2 * y[:, 2:3].astype(dt)


def se_layer(x, w1, b1, w2, b2, *, block_b=None,
             vmem_limit_bytes=32 * 1024 * 1024):
    B, H, D = x.shape
    assert H == 3, "SELayer expects 3 'modality' rows (H == 3)"
    orig_dtype = x.dtype

    # Gate parameters: tiny, constant across the grid (Pallas skips re-DMA).
    w1t = w1.astype(jnp.float32).T            # (3, 3)
    w2t = w2.astype(jnp.float32).T
    b1 = b1.astype(jnp.float32).reshape(1, 3)
    b2 = b2.astype(jnp.float32).reshape(1, 3)

    # Lane-dense 2-D view: one row per batch sample, 3*D features per row.
    x2 = x.reshape(B, 3 * D)
    row_bytes = 3 * D * jnp.dtype(orig_dtype).itemsize

    if block_b is None:
        # ~4 MiB per x block => ~16 MiB with in+out double buffering, which
        # fits the explicit 32 MiB scoped-VMEM limit on v5e/v6e/v7x alike.
        budget = 4 * 1024 * 1024
        tb = max(1, min(2048, budget // max(1, row_bytes)))
        if tb >= B:
            tb = B
            if B >= 16:
                # Keep >= 2 grid steps so v7x megacore can shard the batch.
                tb = max(8, ((B // 2) // 8) * 8)
        else:
            tb = max(8, (tb // 8) * 8)        # sublane-aligned block rows
        block_b = tb
    block_b = min(block_b, B)

    grid_b = pl.cdiv(B, block_b)
    b_pad = grid_b * block_b
    if b_pad != B:
        # Tail handling: pad with zeros (padded rows produce zero outputs,
        # sliced off below).  Avoids unchecked OOB VMEM writes.
        x2 = jnp.pad(x2, ((0, b_pad - B), (0, 0)))

    out2 = pl.pallas_call(
        functools.partial(_se_kernel, d=D),
        out_shape=jax.ShapeDtypeStruct((b_pad, 3 * D), orig_dtype),
        grid=(grid_b,),
        in_specs=[
            pl.BlockSpec((block_b, 3 * D), lambda i: (i, 0)),
            pl.BlockSpec((3, 3), lambda i: (0, 0)),
            pl.BlockSpec((1, 3), lambda i: (0, 0)),
            pl.BlockSpec((3, 3), lambda i: (0, 0)),
            pl.BlockSpec((1, 3), lambda i: (0, 0)),
        ],
        out_specs=pl.BlockSpec((block_b, 3 * D), lambda i: (i, 0)),
        compiler_params=pltpu.CompilerParams(
            dimension_semantics=("parallel",),
            vmem_limit_bytes=vmem_limit_bytes),
    )(x2, w1t, b1, w2t, b2)

    if b_pad != B:
        out2 = out2[:B]
    return out2.reshape(B, 3, D)


def se_layer_ref(x, w1, b1, w2, b2):
    """Pure-JAX reference (mirrors the PyTorch forward)."""
    avg = jnp.mean(x, axis=-1)                         # (B, 3)
    y = _gelu_exact(avg @ w1.T + b1)                   # fc1
    y = jax.nn.sigmoid(_gelu_exact(y @ w2.T + b2))     # fc2
    return x * y[:, :, None]


def init_params(key):
    # Match torch.nn.Linear default init: U(-1/sqrt(fan_in), 1/sqrt(fan_in)).
    k1, k2, k3, k4 = jax.random.split(key, 4)
    bound = 1.0 / math.sqrt(3.0)
    w1 = jax.random.uniform(k1, (3, 3), jnp.float32, -bound, bound)
    b1 = jax.random.uniform(k2, (3,), jnp.float32, -bound, bound)
    w2 = jax.random.uniform(k3, (3, 3), jnp.float32, -bound, bound)
    b2 = jax.random.uniform(k4, (3,), jnp.float32, -bound, bound)
    return w1, b1, w2, b2


if __name__ == "__main__":
    key = jax.random.PRNGKey(0)
    k_x, k_p = jax.random.split(key)

    B, H, D = 16, 3, 128          # (batch, 3 modalities, feature dim)
    x = jax.random.normal(k_x, (B, H, D), dtype=jnp.float32)
    w1, b1, w2, b2 = init_params(k_p)

    out = se_layer(x, w1, b1, w2, b2)
    out = jax.block_until_ready(out)

    ref = se_layer_ref(x, w1, b1, w2, b2)
    assert out.shape == x.shape and out.dtype == x.dtype
    assert jnp.allclose(out, ref, atol=1e-5, rtol=1e-5), \
        float(jnp.max(jnp.abs(out - ref)))

    print("KERNEL_OK")
</pallas_src>

<mosaic_0001>
module attributes {stable_mosaic.version = 11 : i64} {
  func.func @_se_kernel(%arg0: i32, %arg1: memref<8x384xf32, #tpu.memory_space<vmem>>, %arg2: memref<3x3xf32, #tpu.memory_space<vmem>>, %arg3: memref<1x3xf32, #tpu.memory_space<vmem>>, %arg4: memref<3x3xf32, #tpu.memory_space<vmem>>, %arg5: memref<1x3xf32, #tpu.memory_space<vmem>>, %arg6: memref<8x384xf32, #tpu.memory_space<vmem>>) attributes {dimension_semantics = [#tpu.dimension_semantics<parallel>], iteration_bounds = array<i64: 2>, scalar_prefetch = 0 : i64, scratch_operands = 0 : i64, tpu.core_type = #tpu.core_type<tc>, window_params = [{transform_indices = @transform_0, window_bounds = array<i64: 8, 384>}, {pipeline_mode = #tpu.pipeline_mode<synchronous>, transform_indices = @transform_1, window_bounds = array<i64: 3, 3>}, {pipeline_mode = #tpu.pipeline_mode<synchronous>, transform_indices = @transform_2, window_bounds = array<i64: 1, 3>}, {pipeline_mode = #tpu.pipeline_mode<synchronous>, transform_indices = @transform_3, window_bounds = array<i64: 3, 3>}, {pipeline_mode = #tpu.pipeline_mode<synchronous>, transform_indices = @transform_4, window_bounds = array<i64: 1, 3>}, {transform_indices = @transform_5, window_bounds = array<i64: 8, 384>}]} {
    %c0 = arith.constant 0 : index
    %c0_0 = arith.constant 0 : index
    %0 = vector.load %arg2[%c0, %c0_0] : memref<3x3xf32, #tpu.memory_space<vmem>>, vector<3x3xf32>
    %c0_1 = arith.constant 0 : index
    %c0_2 = arith.constant 0 : index
    %1 = vector.load %arg4[%c0_1, %c0_2] : memref<3x3xf32, #tpu.memory_space<vmem>>, vector<3x3xf32>
    %c0_3 = arith.constant 0 : index
    %c0_4 = arith.constant 0 : index
    %2 = vector.load %arg3[%c0_3, %c0_4] : memref<1x3xf32, #tpu.memory_space<vmem>>, vector<1x3xf32>
    %c0_5 = arith.constant 0 : index
    %c0_6 = arith.constant 0 : index
    %3 = vector.load %arg5[%c0_5, %c0_6] : memref<1x3xf32, #tpu.memory_space<vmem>>, vector<1x3xf32>
    %c0_7 = arith.constant 0 : index
    %c0_8 = arith.constant 0 : index
    %4 = vector.load %arg1[%c0_7, %c0_8] : memref<8x384xf32, #tpu.memory_space<vmem>>, vector<8x128xf32>
    %c0_9 = arith.constant 0 : index
    %c128 = arith.constant 128 : index
    %5 = vector.load %arg1[%c0_9, %c128] : memref<8x384xf32, #tpu.memory_space<vmem>>, vector<8x128xf32>
    %c0_10 = arith.constant 0 : index
    %c256 = arith.constant 256 : index
    %6 = vector.load %arg1[%c0_10, %c256] : memref<8x384xf32, #tpu.memory_space<vmem>>, vector<8x128xf32>
    %cst = arith.constant dense<0.000000e+00> : vector<8xf32>
    %7 = vector.multi_reduction <add>, %4, %cst [1] : vector<8x128xf32> to vector<8xf32>
    %8 = vector.shape_cast %7 : vector<8xf32> to vector<8x1xf32>
    %cst_11 = arith.constant 1.280000e+02 : f32
    %9 = vector.broadcast %cst_11 : f32 to vector<8x1xf32>
    %10 = arith.divf %8, %9 : vector<8x1xf32>
    %cst_12 = arith.constant dense<0.000000e+00> : vector<8xf32>
    %11 = vector.multi_reduction <add>, %5, %cst_12 [1] : vector<8x128xf32> to vector<8xf32>
    %12 = vector.shape_cast %11 : vector<8xf32> to vector<8x1xf32>
    %cst_13 = arith.constant 1.280000e+02 : f32
    %13 = vector.broadcast %cst_13 : f32 to vector<8x1xf32>
    %14 = arith.divf %12, %13 : vector<8x1xf32>
    %cst_14 = arith.constant dense<0.000000e+00> : vector<8xf32>
    %15 = vector.multi_reduction <add>, %6, %cst_14 [1] : vector<8x128xf32> to vector<8xf32>
    %16 = vector.shape_cast %15 : vector<8xf32> to vector<8x1xf32>
    %cst_15 = arith.constant 1.280000e+02 : f32
    %17 = vector.broadcast %cst_15 : f32 to vector<8x1xf32>
    %18 = arith.divf %16, %17 : vector<8x1xf32>
    %19 = vector.extract_strided_slice %0 {offsets = [0, 0], sizes = [1, 3], strides = [1, 1]} : vector<3x3xf32> to vector<1x3xf32>
    %20 = vector.broadcast %10 : vector<8x1xf32> to vector<8x3xf32>
    %21 = vector.broadcast %19 : vector<1x3xf32> to vector<8x3xf32>
    %22 = arith.mulf %20, %21 : vector<8x3xf32>
    %23 = vector.extract_strided_slice %0 {offsets = [1, 0], sizes = [1, 3], strides = [1, 1]} : vector<3x3xf32> to vector<1x3xf32>
    %24 = vector.broadcast %14 : vector<8x1xf32> to vector<8x3xf32>
    %25 = vector.broadcast %23 : vector<1x3xf32> to vector<8x3xf32>
    %26 = arith.mulf %24, %25 : vector<8x3xf32>
    %27 = arith.addf %22, %26 : vector<8x3xf32>
    %28 = vector.extract_strided_slice %0 {offsets = [2, 0], sizes = [1, 3], strides = [1, 1]} : vector<3x3xf32> to vector<1x3xf32>
    %29 = vector.broadcast %18 : vector<8x1xf32> to vector<8x3xf32>
    %30 = vector.broadcast %28 : vector<1x3xf32> to vector<8x3xf32>
    %31 = arith.mulf %29, %30 : vector<8x3xf32>
    %32 = arith.addf %27, %31 : vector<8x3xf32>
    %33 = vector.broadcast %2 : vector<1x3xf32> to vector<8x3xf32>
    %34 = arith.addf %32, %33 : vector<8x3xf32>
    %cst_16 = arith.constant 5.000000e-01 : f32
    %35 = vector.broadcast %cst_16 : f32 to vector<8x3xf32>
    %36 = arith.mulf %35, %34 : vector<8x3xf32>
    %cst_17 = arith.constant 0.707106769 : f32
    %37 = vector.broadcast %cst_17 : f32 to vector<8x3xf32>
    %38 = arith.mulf %34, %37 : vector<8x3xf32>
    %39 = math.erf %38 : vector<8x3xf32>
    %cst_18 = arith.constant 1.000000e+00 : f32
    %40 = vector.broadcast %cst_18 : f32 to vector<8x3xf32>
    %41 = arith.addf %40, %39 : vector<8x3xf32>
    %42 = arith.mulf %36, %41 : vector<8x3xf32>
    %43 = vector.extract_strided_slice %42 {offsets = [0, 0], sizes = [8, 1], strides = [1, 1]} : vector<8x3xf32> to vector<8x1xf32>
    %44 = vector.extract_strided_slice %1 {offsets = [0, 0], sizes = [1, 3], strides = [1, 1]} : vector<3x3xf32> to vector<1x3xf32>
    %45 = vector.broadcast %43 : vector<8x1xf32> to vector<8x3xf32>
    %46 = vector.broadcast %44 : vector<1x3xf32> to vector<8x3xf32>
    %47 = arith.mulf %45, %46 : vector<8x3xf32>
    %48 = vector.extract_strided_slice %42 {offsets = [0, 1], sizes = [8, 1], strides = [1, 1]} : vector<8x3xf32> to vector<8x1xf32>
    %49 = vector.extract_strided_slice %1 {offsets = [1, 0], sizes = [1, 3], strides = [1, 1]} : vector<3x3xf32> to vector<1x3xf32>
    %50 = vector.broadcast %48 : vector<8x1xf32> to vector<8x3xf32>
    %51 = vector.broadcast %49 : vector<1x3xf32> to vector<8x3xf32>
    %52 = arith.mulf %50, %51 : vector<8x3xf32>
    %53 = arith.addf %47, %52 : vector<8x3xf32>
    %54 = vector.extract_strided_slice %42 {offsets = [0, 2], sizes = [8, 1], strides = [1, 1]} : vector<8x3xf32> to vector<8x1xf32>
    %55 = vector.extract_strided_slice %1 {offsets = [2, 0], sizes = [1, 3], strides = [1, 1]} : vector<3x3xf32> to vector<1x3xf32>
    %56 = vector.broadcast %54 : vector<8x1xf32> to vector<8x3xf32>
    %57 = vector.broadcast %55 : vector<1x3xf32> to vector<8x3xf32>
    %58 = arith.mulf %56, %57 : vector<8x3xf32>
    %59 = arith.addf %53, %58 : vector<8x3xf32>
    %60 = vector.broadcast %3 : vector<1x3xf32> to vector<8x3xf32>
    %61 = arith.addf %59, %60 : vector<8x3xf32>
    %cst_19 = arith.constant 5.000000e-01 : f32
    %62 = vector.broadcast %cst_19 : f32 to vector<8x3xf32>
    %63 = arith.mulf %62, %61 : vector<8x3xf32>
    %cst_20 = arith.constant 0.707106769 : f32
    %64 = vector.broadcast %cst_20 : f32 to vector<8x3xf32>
    %65 = arith.mulf %61, %64 : vector<8x3xf32>
    %66 = math.erf %65 : vector<8x3xf32>
    %cst_21 = arith.constant 1.000000e+00 : f32
    %67 = vector.broadcast %cst_21 : f32 to vector<8x3xf32>
    %68 = arith.addf %67, %66 : vector<8x3xf32>
    %69 = arith.mulf %63, %68 : vector<8x3xf32>
    %70 = arith.negf %69 : vector<8x3xf32>
    %71 = math.exp %70 : vector<8x3xf32>
    %cst_22 = arith.constant 1.000000e+00 : f32
    %72 = vector.broadcast %cst_22 : f32 to vector<8x3xf32>
    %73 = arith.addf %72, %71 : vector<8x3xf32>
    %74 = arith.divf %72, %73 : vector<8x3xf32>
    %75 = vector.extract_strided_slice %74 {offsets = [0, 0], sizes = [8, 1], strides = [1, 1]} : vector<8x3xf32> to vector<8x1xf32>
    %76 = vector.broadcast %75 : vector<8x1xf32> to vector<8x128xf32>
    %77 = arith.mulf %4, %76 : vector<8x128xf32>
    %c0_23 = arith.constant 0 : index
    %c0_24 = arith.constant 0 : index
    %78 = vector.load %arg6[%c0_23, %c0_24] : memref<8x384xf32, #tpu.memory_space<vmem>>, vector<8x128xf32>
    tpu.vector_store %arg6[%c0_23, %c0_24], %77 {strides = array<i32>} : memref<8x384xf32, #tpu.memory_space<vmem>>, vector<8x128xf32>,
    %79 = vector.extract_strided_slice %74 {offsets = [0, 1], sizes = [8, 1], strides = [1, 1]} : vector<8x3xf32> to vector<8x1xf32>
    %80 = vector.broadcast %79 : vector<8x1xf32> to vector<8x128xf32>
    %81 = arith.mulf %5, %80 : vector<8x128xf32>
    %c0_25 = arith.constant 0 : index
    %c128_26 = arith.constant 128 : index
    %82 = vector.load %arg6[%c0_25, %c128_26] : memref<8x384xf32, #tpu.memory_space<vmem>>, vector<8x128xf32>
    tpu.vector_store %arg6[%c0_25, %c128_26], %81 {strides = array<i32>} : memref<8x384xf32, #tpu.memory_space<vmem>>, vector<8x128xf32>,
    %83 = vector.extract_strided_slice %74 {offsets = [0, 2], sizes = [8, 1], strides = [1, 1]} : vector<8x3xf32> to vector<8x1xf32>
    %84 = vector.broadcast %83 : vector<8x1xf32> to vector<8x128xf32>
    %85 = arith.mulf %6, %84 : vector<8x128xf32>
    %c0_27 = arith.constant 0 : index
    %c256_28 = arith.constant 256 : index
    %86 = vector.load %arg6[%c0_27, %c256_28] : memref<8x384xf32, #tpu.memory_space<vmem>>, vector<8x128xf32>
    tpu.vector_store %arg6[%c0_27, %c256_28], %85 {strides = array<i32>} : memref<8x384xf32, #tpu.memory_space<vmem>>, vector<8x128xf32>,
    return
  }
  func.func @transform_0(%arg0: i32) -> (i32, i32) {
    %c0_i32 = arith.constant 0 : i32
    %c0_i32_0 = arith.constant 0 : i32
    return %arg0, %c0_i32 : i32, i32
  }
  func.func @transform_1(%arg0: i32) -> (i32, i32) {
    %c0_i32 = arith.constant 0 : i32
    %c0_i32_0 = arith.constant 0 : i32
    %c0_i32_1 = arith.constant 0 : i32
    return %c0_i32, %c0_i32_0 : i32, i32
  }
  func.func @transform_2(%arg0: i32) -> (i32, i32) {
    %c0_i32 = arith.constant 0 : i32
    %c0_i32_0 = arith.constant 0 : i32
    %c0_i32_1 = arith.constant 0 : i32
    return %c0_i32, %c0_i32_0 : i32, i32
  }
  func.func @transform_3(%arg0: i32) -> (i32, i32) {
    %c0_i32 = arith.constant 0 : i32
    %c0_i32_0 = arith.constant 0 : i32
    %c0_i32_1 = arith.constant 0 : i32
    return %c0_i32, %c0_i32_0 : i32, i32
  }
  func.func @transform_4(%arg0: i32) -> (i32, i32) {
    %c0_i32 = arith.constant 0 : i32
    %c0_i32_0 = arith.constant 0 : i32
    %c0_i32_1 = arith.constant 0 : i32
    return %c0_i32, %c0_i32_0 : i32, i32
  }
  func.func @transform_5(%arg0: i32) -> (i32, i32) {
    %c0_i32 = arith.constant 0 : i32
    %c0_i32_0 = arith.constant 0 : i32
    return %arg0, %c0_i32 : i32, i32
  }
}

</mosaic_0001>

<llo_original>
// kernel: tpu_custom_call.1
$region0: #{tpu_custom_call.1}
  #allocation0 [shape = 'u32[]', space=smem, size = 0x4, offset = 0x4, fixed_abs, tag = 'smem constant byte address 0x4 - core index']
  #allocation1 [shape = 'u32[144,128]{1,0:T(1,128)}', space=vmem, size = 0x12000, scoped, tag = 'internal scratch']
  %s0 = inlined_call_operand.hbm [shape: f32[16,384], index: 0, kind: input, shape index: {}]
  %s1 = inlined_call_operand.hbm [shape: f32[3,3], index: 1, kind: input, shape index: {}]
  %s2 = inlined_call_operand.vmem [shape: f32[1,3], index: 2, kind: input, shape index: {}]
  %s3 = inlined_call_operand.vmem [shape: f32[3,3], index: 3, kind: input, shape index: {}]
  %s4 = inlined_call_operand.vmem [shape: f32[1,3], index: 4, kind: input, shape index: {}]
  %s5 = inlined_call_operand.hbm [shape: f32[16,384], index: 5, kind: output, shape index: {}]
  %s6 = sld [smem:[#allocation0]]
  $region61: #{tpu_custom_call.1} parent=0
    _
  %s8 = ssub.s32 1, %s6
  %s9 = scalar_select 0, %s8, %s6
  $region1: #{tpu_custom_call.1} parent=0
    #allocation2 [shape = 'u8[24576]{0}', space=vmem, size = 0x6000, scoped, tag = 'input window, operand 0']
    #allocation3 [shape = 's32[2]{0}', space=sflag, size = 0x8, scoped, tag = 'scoped memory for tpu_custom_call.1']
    #allocation4 [shape = 's32[2]{0}', space=sflag, size = 0x8, scoped, tag = 'scoped memory for tpu_custom_call.1']
    #allocation5 [shape = 'u8[2048]{0}', space=vmem, size = 0x800, scoped, tag = 'input window, operand 1, single buffered']
    #allocation6 [shape = 's32[1]{0}', space=sflag, size = 0x4, scoped, tag = 'scoped memory for tpu_custom_call.1']
    #allocation7 [shape = 'u8[24576]{0}', space=vmem, size = 0x6000, scoped, tag = 'output window, operand 0']
    %10 = vsyncpa [#allocation3], 0
    %s11 = scalar_lea.sflag [#allocation3], 1
    %12 = vsyncpa %s11, 0
    %13 = vsyncpa [#allocation6], 0
    %14 = vsyncpa [#allocation4], 0
    %s15 = scalar_lea.sflag [#allocation4], 1
    %16 = vsyncpa %s15, 0
    loop: start=0, step=1, limit=4
    $region2: #{tpu_custom_call.1} parent=1 // loop_pre_header
      _
    $region3: #{tpu_custom_call.1} parent=1 // loop_header
      %s18 = sphi 0, %s22
      %p19 = scmp.ge.s32.totalorder %s18, 4
      %s28 = sphi 0, %s30
      %s31 = sphi 0, %s28
      %s32 = sphi 0, %s31
      %s48 = sphi 0, %s32
      %s52 = sphi 0, %s52
      %s54 = sphi 0, %s52
      %s55 = sphi 0, %s54
      %s69 = sphi 0, %s55
      %s73 = sphi 0, %s73
      %s75 = sphi 0, %s73
      %s76 = sphi 0, %s75
      %s90 = sphi 0, %s76
      %s94 = sphi 0, %s94
      %s96 = sphi 0, %s94
      %s97 = sphi 0, %s96
      %s111 = sphi 0, %s97
      %s115 = sphi 0, %s115
      %s117 = sphi 0, %s115
      %s118 = sphi 0, %s117
      %s132 = sphi 0, %s118
      %s138 = sphi 0, %s140
      %s141 = sphi 0, %s138
      %s142 = sphi 0, %s141
      %s158 = sphi 0, %s142
    $region4: #{tpu_custom_call.1} parent=1 // loop_header_branch
      %21 = sbr.rel (%p19) target = $region8
    $region5: #{tpu_custom_call.1} parent=1 // loop_body
      %s23 = ssub.s32 %s18, 1
      %s24 = ssub.s32 %s18, 2
      %s25 = sadd.s32 %s18, 1
      %s26 = ssub.s32 %s18, %s25
      %p27 = scmp.eq.s32.totalorder %s26, 0
      %s29 = sadd.s32 %s28, 1
      %s30 = scalar_select %p27, %s28, %s29
      %p33 = pneg %p27
      %p34 = scmp.eq.s32.totalorder %s18, 1
      %p35 = por %p33, %p34
      %p36 = scmp.ne.s32.totalorder %s28, %s31
      %p37 = scmp.eq.s32.totalorder %s18, 0
      %p38 = por %p36, %p37
      %p39 = scmp.ne.s32.totalorder %s28, %s31
      %p40 = scmp.eq.s32.totalorder %s23, 1
      %p41 = por %p39, %p40
      %p42 = scmp.ne.s32.totalorder %s31, %s32
      %p43 = scmp.eq.s32.totalorder %s23, 0
      %p44 = por %p42, %p43
      %p45 = scmp.ne.s32.totalorder %s31, %s32
      %p46 = scmp.eq.s32.totalorder %s24, 1
      %p47 = por %p45, %p46
      %p49 = scmp.ne.s32.totalorder %s32, %s48
      %p50 = scmp.eq.s32.totalorder %s24, 0
      %p51 = por %p49, %p50
      %s53 = sadd.s32 %s52, 1
      %p56 = scmp.eq.s32.totalorder %s18, 1
      %p57 = scmp.ne.s32.totalorder %s52, %s54
      %p58 = scmp.eq.s32.totalorder %s18, 0
      %p59 = por %p57, %p58
      %p60 = scmp.ne.s32.totalorder %s52, %s54
      %p61 = scmp.eq.s32.totalorder %s23, 1
      %p62 = por %p60, %p61
      %p63 = scmp.ne.s32.totalorder %s54, %s55
      %p64 = scmp.eq.s32.totalorder %s23, 0
      %p65 = por %p63, %p64
      %p66 = scmp.ne.s32.totalorder %s54, %s55
      %p67 = scmp.eq.s32.totalorder %s24, 1
      %p68 = por %p66, %p67
      %p70 = scmp.ne.s32.totalorder %s55, %s69
      %p71 = scmp.eq.s32.totalorder %s24, 0
      %p72 = por %p70, %p71
      %s74 = sadd.s32 %s73, 1
      %p77 = scmp.eq.s32.totalorder %s18, 1
      %p78 = scmp.ne.s32.totalorder %s73, %s75
      %p79 = scmp.eq.s32.totalorder %s18, 0
      %p80 = por %p78, %p79
      %p81 = scmp.ne.s32.totalorder %s73, %s75
      %p82 = scmp.eq.s32.totalorder %s23, 1
      %p83 = por %p81, %p82
      %p84 = scmp.ne.s32.totalorder %s75, %s76
      %p85 = scmp.eq.s32.totalorder %s23, 0
      %p86 = por %p84, %p85
      %p87 = scmp.ne.s32.totalorder %s75, %s76
      %p88 = scmp.eq.s32.totalorder %s24, 1
      %p89 = por %p87, %p88
      %p91 = scmp.ne.s32.totalorder %s76, %s90
      %p92 = scmp.eq.s32.totalorder %s24, 0
      %p93 = por %p91, %p92
      %s95 = sadd.s32 %s94, 1
      %p98 = scmp.eq.s32.totalorder %s18, 1
      %p99 = scmp.ne.s32.totalorder %s94, %s96
      %p100 = scmp.eq.s32.totalorder %s18, 0
      %p101 = por %p99, %p100
      %p102 = scmp.ne.s32.totalorder %s94, %s96
      %p103 = scmp.eq.s32.totalorder %s23, 1
      %p104 = por %p102, %p103
      %p105 = scmp.ne.s32.totalorder %s96, %s97
      %p106 = scmp.eq.s32.totalorder %s23, 0
      %p107 = por %p105, %p106
      %p108 = scmp.ne.s32.totalorder %s96, %s97
      %p109 = scmp.eq.s32.totalorder %s24, 1
      %p110 = por %p108, %p109
      %p112 = scmp.ne.s32.totalorder %s97, %s111
      %p113 = scmp.eq.s32.totalorder %s24, 0
      %p114 = por %p112, %p113
      %s116 = sadd.s32 %s115, 1
      %p119 = scmp.eq.s32.totalorder %s18, 1
      %p120 = scmp.ne.s32.totalorder %s115, %s117
      %p121 = scmp.eq.s32.totalorder %s18, 0
      %p122 = por %p120, %p121
      %p123 = scmp.ne.s32.totalorder %s115, %s117
      %p124 = scmp.eq.s32.totalorder %s23, 1
      %p125 = por %p123, %p124
      %p126 = scmp.ne.s32.totalorder %s117, %s118
      %p127 = scmp.eq.s32.totalorder %s23, 0
      %p128 = por %p126, %p127
      %p129 = scmp.ne.s32.totalorder %s117, %s118
      %p130 = scmp.eq.s32.totalorder %s24, 1
      %p131 = por %p129, %p130
      %p133 = scmp.ne.s32.totalorder %s118, %s132
      %p134 = scmp.eq.s32.totalorder %s24, 0
      %p135 = por %p133, %p134
      %s136 = ssub.s32 %s18, %s25
      %p137 = scmp.eq.s32.totalorder %s136, 0
      %s139 = sadd.s32 %s138, 1
      %s140 = scalar_select %p137, %s138, %s139
      %p143 = pneg %p137
      %p144 = scmp.eq.s32.totalorder %s18, 1
      %p145 = por %p143, %p144
      %p146 = scmp.ne.s32.totalorder %s138, %s141
      %p147 = scmp.eq.s32.totalorder %s18, 0
      %p148 = por %p146, %p147
      %p149 = scmp.ne.s32.totalorder %s138, %s141
      %p150 = scmp.eq.s32.totalorder %s23, 1
      %p151 = por %p149, %p150
      %p152 = scmp.ne.s32.totalorder %s141, %s142
      %p153 = scmp.eq.s32.totalorder %s23, 0
      %p154 = por %p152, %p153
      %p155 = scmp.ne.s32.totalorder %s141, %s142
      %p156 = scmp.eq.s32.totalorder %s24, 1
      %p157 = por %p155, %p156
      %p159 = scmp.ne.s32.totalorder %s142, %s158
      %p160 = scmp.eq.s32.totalorder %s24, 0
      %p161 = por %p159, %p160
      %p162 = scmp.le.s32.totalorder 1, %s18
      %p163 = scmp.lt.s32.totalorder %s18, 3
      %p164 = pnand %p162, %p163
      %p165 = pneg %p164
      // Predicated region
      $region9: #{tpu_custom_call.1} parent=5 // pred_check
        _
      $region10: #{tpu_custom_call.1} parent=5 // pred_check_branch
        %167 = sbr.rel (%p164) target = $region12
      $region11: #{tpu_custom_call.1} parent=5 // pred_region
        %s168 = ssub.s32 %s18, 1
        // Predicated region
        $region13: #{tpu_custom_call.1} parent=11 // pred_check
          %p169 = pneg %p65
        $region14: #{tpu_custom_call.1} parent=11 // pred_check_branch
          %171 = sbr.rel (%p169) target = $region16
        $region15: #{tpu_custom_call.1} parent=11 // pred_region
          %s173 = ssub.s32 64, 64
          %174 = vsyncadd [#allocation6], %s173
          %s176 = sshll.u32 [#allocation5], 4
          %s177 = int_to_ptr.vmem [resolvable:$true] %s176
          %179 = dma.hbm_to_vmem [thread:$0]  %s1, 64, %s177, [#allocation6]
        $region16: #{tpu_custom_call.1} parent=11 // pred_fallthru
          _
        // Predicated region
        $region17: #{tpu_custom_call.1} parent=11 // pred_check
          %p180 = pneg %p86
        $region18: #{tpu_custom_call.1} parent=11 // pred_check_branch
          %182 = sbr.rel (%p180) target = $region20
        $region19: #{tpu_custom_call.1} parent=11 // pred_region
          _
        $region20: #{tpu_custom_call.1} parent=11 // pred_fallthru
          _
        // Predicated region
        $region21: #{tpu_custom_call.1} parent=11 // pred_check
          %p183 = pneg %p107
        $region22: #{tpu_custom_call.1} parent=11 // pred_check_branch
          %185 = sbr.rel (%p183) target = $region24
        $region23: #{tpu_custom_call.1} parent=11 // pred_region
          _
        $region24: #{tpu_custom_call.1} parent=11 // pred_fallthru
          _
        // Predicated region
        $region25: #{tpu_custom_call.1} parent=11 // pred_check
          %p186 = pneg %p128
        $region26: #{tpu_custom_call.1} parent=11 // pred_check_branch
          %188 = sbr.rel (%p186) target = $region28
        $region27: #{tpu_custom_call.1} parent=11 // pred_region
          _
        $region28: #{tpu_custom_call.1} parent=11 // pred_fallthru
          _
      $region12: #{tpu_custom_call.1} parent=5 // pred_fallthru
        _
      %p189 = scmp.lt.s32.totalorder %s18, 2
      // Predicated region
      $region29: #{tpu_custom_call.1} parent=5 // pred_check
        %p190 = pneg %p189
      $region30: #{tpu_custom_call.1} parent=5 // pred_check_branch
        %192 = sbr.rel (%p190) target = $region32
      $region31: #{tpu_custom_call.1} parent=5 // pred_region
        // Predicated region
        $region33: #{tpu_custom_call.1} parent=31 // pred_check
          %p193 = pneg %p38
        $region34: #{tpu_custom_call.1} parent=31 // pred_check_branch
          %195 = sbr.rel (%p193) target = $region36
        $region35: #{tpu_custom_call.1} parent=31 // pred_region
          %s196 = sand.u32 %s28, 1
          %s197 = scalar_lea.sflag [#allocation3], %s196
          %s198 = sand.u32 %s28, 1
          %s199 = smul.addr %s198, 24
          %s200 = scalar_lea.vmem [#allocation2], %s199
          %s202 = ssub.s32 384, 384
          %203 = vsyncadd %s197, %s202
          %s204 = smul.addr %s18, 3
          %s205 = smul.addr %s204, 128
          %s206 = scalar_lea.hbm %s0, %s205
          %s208 = sshll.u32 %s200, 4
          %s209 = int_to_ptr.vmem [resolvable:$true] %s208
          %211 = dma.hbm_to_vmem [thread:$0]  %s206, 384, %s209, %s197
        $region36: #{tpu_custom_call.1} parent=31 // pred_fallthru
          _
      $region32: #{tpu_custom_call.1} parent=5 // pred_fallthru
        _
      %p212 = scmp.le.s32.totalorder 1, %s18
      %p213 = scmp.lt.s32.totalorder %s18, 3
      %p214 = pnand %p212, %p213
      %p215 = pneg %p214
      // Predicated region
      $region37: #{tpu_custom_call.1} parent=5 // pred_check
        _
      $region38: #{tpu_custom_call.1} parent=5 // pred_check_branch
        %217 = sbr.rel (%p214) target = $region40
      $region39: #{tpu_custom_call.1} parent=5 // pred_region
        %s218 = ssub.s32 %s18, 1
        %s219 = sand.u32 %s31, 1
        %s220 = scalar_lea.sflag [#allocation3], %s219
        %s221 = sand.u32 %s31, 1
        %s222 = smul.addr %s221, 24
        %s223 = scalar_lea.vmem [#allocation2], %s222
        // Predicated region
        $region41: #{tpu_custom_call.1} parent=39 // pred_check
          %p224 = pneg %p44
        $region42: #{tpu_custom_call.1} parent=39 // pred_check_branch
          %226 = sbr.rel (%p224) target = $region44
        $region43: #{tpu_custom_call.1} parent=39 // pred_region
          %227 = dma.done %s220, 384
        $region44: #{tpu_custom_call.1} parent=39 // pred_fallthru
          _
        // Predicated region
        $region45: #{tpu_custom_call.1} parent=39 // pred_check
          %p228 = pneg %p65
        $region46: #{tpu_custom_call.1} parent=39 // pred_check_branch
          %230 = sbr.rel (%p228) target = $region48
        $region47: #{tpu_custom_call.1} parent=39 // pred_region
          %231 = dma.done [#allocation6], 64
        $region48: #{tpu_custom_call.1} parent=39 // pred_fallthru
          _
        %s232 = sand.u32 %s31, 1
        %s233 = scalar_lea.sflag [#allocation3], %s232
        %s234 = sand.u32 %s31, 1
        %s235 = smul.addr %s234, 24
        %s236 = scalar_lea.vmem [#allocation2], %s235
        %p237 = pneg %p44
        %p238 = pneg %p41
        %p239 = pneg %p65
        %p240 = pneg %p62
        %p241 = pneg %p86
        %p242 = pneg %p83
        %p243 = pneg %p107
        %p244 = pneg %p104
        %p245 = pneg %p128
        %p246 = pneg %p125
        %p247 = pneg %p154
        %p248 = pneg %p151
        %s249 = sand.u32 %s141, 1
        %s250 = scalar_lea.sflag [#allocation4], %s249
        %s251 = sand.u32 %s141, 1
        %s252 = smul.addr %s251, 24
        %s253 = scalar_lea.vmem [#allocation7], %s252
        %v254 = vld [vmem:[#allocation5] sm:$0x7]
        %v255 = vld [vmem:[%s3] sm:$0x7]
        %v256 = vld [vmem:[%s2] sm:$0x1]
        %v257 = vld [vmem:[%s4] sm:$0x1]
        %v258 = vld [vmem:[%s223] sm:$0xff]
        %v259 = vld [vmem:[%s223 + $0x8] sm:$0xff]
        %v260 = vld [vmem:[%s223 + $0x10] sm:$0xff]
        %261 = vadd.xlane.f32.xlu0 %v258
        %v262 = vpop.xlane.xlu0 %261
        %v263 = vrcp.pop 128.0
        %v264 = vmul.f32 %v262, %v263
        %265 = vadd.xlane.f32.xlu0 %v259
        %v266 = vpop.xlane.xlu0 %265
        %v267 = vmul.f32 %v266, %v263
        %268 = vadd.xlane.f32.xlu0 %v260
        %v269 = vpop.xlane.xlu0 %268
        %v270 = vmul.f32 %v269, %v263
        %v271 = vlaneseq
        %v272 = vshrl.u32 %v271, 7
        %v273 = vsub.s32 0, %v272
        %v274 = vrot.slane %v254, %v273
        %v275 = vmul.f32 %v264, %v274
        %v276 = vlaneseq
        %v277 = vshrl.u32 %v276, 7
        %v278 = vsub.s32 1, %v277
        %v279 = vrot.slane %v254, %v278
        %v280 = vmul.f32 %v267, %v279
        %v281 = vadd.f32 %v275, %v280
        %v282 = vlaneseq
        %v283 = vshrl.u32 %v282, 7
        %v284 = vsub.s32 2, %v283
        %v285 = vrot.slane %v254, %v284
        %v286 = vmul.f32 %v270, %v285
        %v287 = vadd.f32 %v281, %v286
        %v289 = vlaneseq
        %v290 = vshrl.u32 %v289, 7
        %v291 = vsub.s32 0, %v290
        %v292 = vrot.slane %v256, %v291
        %v294 = vadd.f32 %v287, %v292
        %v295 = vmul.f32 %v294, 0.5
        %v296 = vmul.f32 %v294, 0.70710677
        %v297 = verf.f32.pop %v296
        %v298 = vadd.f32 %v297, 1.0
        %v299 = vmul.f32 %v295, %v298
        %301 = vset.pattern.permute.xlu0 0
        %302 = vperm.xlu0 %301, %v299
        %v303 = vpop.permute.xlu0 %302
        %v305 = vlaneseq
        %v306 = vshrl.u32 %v305, 7
        %v307 = vsub.s32 0, %v306
        %v308 = vrot.slane %v255, %v307
        %v309 = vmul.f32 %v303, %v308
        %310 = vset.pattern.permute.xlu0 1
        %311 = vperm.xlu0 %310, %v299
        %v312 = vpop.permute.xlu0 %311
        %v314 = vlaneseq
        %v315 = vshrl.u32 %v314, 7
        %v316 = vsub.s32 1, %v315
        %v317 = vrot.slane %v255, %v316
        %v318 = vmul.f32 %v312, %v317
        %v319 = vadd.f32 %v309, %v318
        %320 = vset.pattern.permute.xlu0 2
        %321 = vperm.xlu0 %320, %v299
        %v322 = vpop.permute.xlu0 %321
        %v324 = vlaneseq
        %v325 = vshrl.u32 %v324, 7
        %v326 = vsub.s32 2, %v325
        %v327 = vrot.slane %v255, %v326
        %v328 = vmul.f32 %v322, %v327
        %v329 = vadd.f32 %v319, %v328
        %v331 = vlaneseq
        %v332 = vshrl.u32 %v331, 7
        %v333 = vsub.s32 0, %v332
        %v334 = vrot.slane %v257, %v333
        %v336 = vadd.f32 %v329, %v334
        %v337 = vmul.f32 %v336, 0.5
        %v338 = vmul.f32 %v336, 0.70710677
        %v339 = verf.f32.pop %v338
        %v340 = vadd.f32 %v339, 1.0
        %v341 = vmul.f32 %v337, %v340
        %v342 = vxor.u32 %v341, 2147483648
        %v343 = vmul.f32 %v342, 1.442695
        %v344 = vpow.pop %v343
        %v345 = vadd.f32 %v344, 1.0
        %v346 = vrcp.pop %v345
        %v347 = vmul.f32 1.0, %v346
        %349 = vset.pattern.permute.xlu0 0
        %350 = vperm.xlu0 %349, %v347
        %v351 = vpop.permute.xlu0 %350
        %v353 = vmul.f32 %v258, %v351
        %354 = vst [vmem:[%s253] sm:$0xff] %v353
        %355 = vset.pattern.permute.xlu0 1
        %356 = vperm.xlu0 %355, %v347
        %v357 = vpop.permute.xlu0 %356
        %v359 = vmul.f32 %v259, %v357
        %360 = vst [vmem:[%s253 + $0x8] sm:$0xff] %v359
        %361 = vset.pattern.permute.xlu0 2
        %362 = vperm.xlu0 %361, %v347
        %v363 = vpop.permute.xlu0 %362
        %v365 = vmul.f32 %v260, %v363
        %366 = vst [vmem:[%s253 + $0x10] sm:$0xff] %v365
        %s367 = sand.u32 %s141, 1
        %s368 = scalar_lea.sflag [#allocation4], %s367
        %s369 = sand.u32 %s141, 1
        %s370 = smul.addr %s369, 24
        %s371 = scalar_lea.vmem [#allocation7], %s370
        // Predicated region
        $region49: #{tpu_custom_call.1} parent=39 // pred_check
          %p372 = pneg %p151
        $region50: #{tpu_custom_call.1} parent=39 // pred_check_branch
          %374 = sbr.rel (%p372) target = $region52
        $region51: #{tpu_custom_call.1} parent=39 // pred_region
          %s376 = ssub.s32 384, 384
          %377 = vsyncadd %s368, %s376
          %s378 = smul.addr %s23, 3
          %s379 = smul.addr %s378, 128
          %s380 = scalar_lea.hbm %s5, %s379
          %s382 = sshll.u32 %s371, 4
          %s383 = int_to_ptr.vmem [resolvable:$true] %s382
          %385 = dma.vmem_to_hbm [thread:$0]  %s383, 384, %s380, %s368
        $region52: #{tpu_custom_call.1} parent=39 // pred_fallthru
          _
      $region40: #{tpu_custom_call.1} parent=5 // pred_fallthru
        _
      %p386 = scmp.le.s32.totalorder 2, %s18
      // Predicated region
      $region53: #{tpu_custom_call.1} parent=5 // pred_check
        %p387 = pneg %p386
      $region54: #{tpu_custom_call.1} parent=5 // pred_check_branch
        %389 = sbr.rel (%p387) target = $region56
      $region55: #{tpu_custom_call.1} parent=5 // pred_region
        %s390 = ssub.s32 %s18, 2
        // Predicated region
        $region57: #{tpu_custom_call.1} parent=55 // pred_check
          %p391 = pneg %p157
        $region58: #{tpu_custom_call.1} parent=55 // pred_check_branch
          %393 = sbr.rel (%p391) target = $region60
        $region59: #{tpu_custom_call.1} parent=55 // pred_region
          %s394 = sand.u32 %s142, 1
          %s395 = scalar_lea.sflag [#allocation4], %s394
          %s396 = sand.u32 %s142, 1
          %s397 = smul.addr %s396, 24
          %s398 = scalar_lea.vmem [#allocation7], %s397
          %399 = dma.done %s395, 384
        $region60: #{tpu_custom_call.1} parent=55 // pred_fallthru
          _
      $region56: #{tpu_custom_call.1} parent=5 // pred_fallthru
        _
    $region6: #{tpu_custom_call.1} parent=1 // loop_footer
      %s22 = sadd.s32 1, %s18
    $region7: #{tpu_custom_call.1} parent=1 // loop_footer_branch
      %17 = sbr.rel target = $region3
    $region8: #{tpu_custom_call.1} parent=1 // loop_exit
      _
    %400 = vsyncpa [#allocation3], 1
    %s401 = scalar_lea.sflag [#allocation3], 1
    %402 = vsyncpa %s401, 1
    %403 = vsyncpa [#allocation6], 1
    %404 = vsyncpa [#allocation4], 1
    %s405 = scalar_lea.sflag [#allocation4], 1
    %406 = vsyncpa %s405, 1

</llo_original>
